<compile_context>
chip_gen: v7x
topology: tpu7x:2x2x1
jax: 0.10.0
libtpu: 0.0.40
codegen_flags: <defaults>
</compile_context>

<pallas_src>
import functools

import jax
import jax.numpy as jnp
import numpy as np
from jax import lax
from jax.experimental import pallas as pl
from jax.experimental.pallas import tpu as pltpu

_LANES = 512           # lane-dense last dim (multiple of 128)
_MAX_TILE_ROWS = 512   # 512 x 512 f32 = 1 MiB per input tile


def _loss_partial_kernel(sd1_ref, sd2_ref, d1_ref, d2_ref, dd1_ref, dd2_ref,
                         out_ref, *, tile_rows, lanes, rows_valid, needs_mask):
    f32 = jnp.float32
    sd1 = sd1_ref[...].astype(f32)   # src_down1
    sd2 = sd2_ref[...].astype(f32)   # src_down2
    d1 = d1_ref[...].astype(f32)     # down1_dst
    d2 = d2_ref[...].astype(f32)     # down2_dst
    dd1 = dd1_ref[...].astype(f32)   # downsample(dst)[0]
    dd2 = dd2_ref[...].astype(f32)   # downsample(dst)[1]

    loss_res = 0.5 * ((d1 - sd2) ** 2 + (d2 - sd1) ** 2)
    loss_cons = 0.5 * ((d1 - dd1) ** 2 + (d2 - dd2) ** 2)
    total = loss_res + loss_cons

    if needs_mask:
        # Zero out rows of the (padded) boundary block that lie past the data.
        row0 = pl.program_id(0) * tile_rows
        rid = row0 + lax.broadcasted_iota(jnp.int32, (tile_rows, 1), 0)
        total = jnp.where(rid < rows_valid, total, 0.0)

    # Fold the tile to an (8, 128) partial with static, tile-aligned slices:
    # these are whole-vreg adds (pure VPU), no cross-lane/sublane work here.
    acc = total[0:8, :]
    for r in range(1, tile_rows // 8):
        acc = acc + total[r * 8:(r + 1) * 8, :]
    part = acc[:, 0:128]
    for c in range(1, lanes // 128):
        part = part + acc[:, c * 128:(c + 1) * 128]

    out_ref[...] = part


def _downsample_pair(dst):
    """ZS-N2N pair downsampler: depthwise 2x2 conv, stride 2, diagonal kernels.

    Strided-slice + add is fused by XLA into one pass over dst; only the two
    half-resolution results hit HBM (no dst-sized stacked-phases intermediate).
    """
    dd1 = 0.5 * (dst[:, :, 0::2, 1::2] + dst[:, :, 1::2, 0::2])
    dd2 = 0.5 * (dst[:, :, 0::2, 0::2] + dst[:, :, 1::2, 1::2])
    return dd1, dd2


@jax.jit
def loss_pallas(src_down1, src_down2, dst, down1_dst, down2_dst):
    n, c, hd, wd = down1_dst.shape
    t = n * c * hd * wd

    dd1, dd2 = _downsample_pair(dst)

    lanes = _LANES
    chunk = 8 * lanes                       # keep rows a multiple of 8
    t_pad = ((t + chunk - 1) // chunk) * chunk
    pad = t_pad - t
    rows = t_pad // lanes

    def to2d(x):
        flat = x.reshape(-1)
        if pad:
            # Rare fallback (only when t % 4096 != 0); zero padding on all six
            # operands contributes exactly 0 to every squared-difference term.
            flat = jnp.pad(flat, (0, pad))
        return flat.reshape(rows, lanes)

    operands = [to2d(a) for a in
                (src_down1, src_down2, down1_dst, down2_dst, dd1, dd2)]

    tile_rows = min(_MAX_TILE_ROWS, rows)
    grid_m = pl.cdiv(rows, tile_rows)
    needs_mask = (grid_m * tile_rows != rows)

    kernel = functools.partial(
        _loss_partial_kernel,
        tile_rows=tile_rows, lanes=lanes, rows_valid=rows, needs_mask=needs_mask)

    in_spec = pl.BlockSpec((tile_rows, lanes), lambda i: (i, 0))
    partials = pl.pallas_call(
        kernel,
        out_shape=jax.ShapeDtypeStruct((grid_m * 8, 128), jnp.float32),
        grid=(grid_m,),
        in_specs=[in_spec] * 6,
        out_specs=pl.BlockSpec((8, 128), lambda i: (i, 0)),
        compiler_params=pltpu.CompilerParams(
            dimension_semantics=("parallel",),          # both TCs on v7x
            vmem_limit_bytes=32 * 1024 * 1024),          # 6*2*1MiB tiles + slack
    )(*operands)

    inv_count = 1.0 / float(t)
    return jnp.sum(partials) * inv_count


def _loss_reference(src_down1, src_down2, dst, down1_dst, down2_dst):
    """Pure-JAX reference for validation."""
    dst_down1 = 0.5 * (dst[:, :, 0::2, 1::2] + dst[:, :, 1::2, 0::2])
    dst_down2 = 0.5 * (dst[:, :, 0::2, 0::2] + dst[:, :, 1::2, 1::2])
    loss_res = 0.5 * ((down1_dst - src_down2) ** 2 + (down2_dst - src_down1) ** 2)
    loss_cons = 0.5 * ((down1_dst - dst_down1) ** 2 + (down2_dst - dst_down2) ** 2)
    return jnp.mean(loss_res + loss_cons)


if __name__ == "__main__":
    key = jax.random.PRNGKey(0)
    k1, k2, k3, k4, k5 = jax.random.split(key, 5)

    N, C, H, W = 2, 4, 16, 16
    Hd, Wd = H // 2, W // 2

    dst = jax.random.normal(k3, (N, C, H, W), jnp.float32)
    src_down1 = jax.random.normal(k1, (N, C, Hd, Wd), jnp.float32)
    src_down2 = jax.random.normal(k2, (N, C, Hd, Wd), jnp.float32)
    down1_dst = jax.random.normal(k4, (N, C, Hd, Wd), jnp.float32)
    down2_dst = jax.random.normal(k5, (N, C, Hd, Wd), jnp.float32)

    out = jax.block_until_ready(
        loss_pallas(src_down1, src_down2, dst, down1_dst, down2_dst)
    )
    ref = _loss_reference(src_down1, src_down2, dst, down1_dst, down2_dst)

    np.testing.assert_allclose(np.asarray(out), np.asarray(ref), rtol=1e-5, atol=1e-5)
    print("KERNEL_OK")
</pallas_src>

<mosaic_0001>
module attributes {stable_mosaic.version = 11 : i64} {
  func.func @_loss_partial_kernel(%arg0: i32, %arg1: memref<8x512xf32, #tpu.memory_space<vmem>>, %arg2: memref<8x512xf32, #tpu.memory_space<vmem>>, %arg3: memref<8x512xf32, #tpu.memory_space<vmem>>, %arg4: memref<8x512xf32, #tpu.memory_space<vmem>>, %arg5: memref<8x512xf32, #tpu.memory_space<vmem>>, %arg6: memref<8x512xf32, #tpu.memory_space<vmem>>, %arg7: memref<8x128xf32, #tpu.memory_space<vmem>>) attributes {dimension_semantics = [#tpu.dimension_semantics<parallel>], iteration_bounds = array<i64: 1>, scalar_prefetch = 0 : i64, scratch_operands = 0 : i64, tpu.core_type = #tpu.core_type<tc>, window_params = [{transform_indices = @transform_0, window_bounds = array<i64: 8, 512>}, {transform_indices = @transform_1, window_bounds = array<i64: 8, 512>}, {transform_indices = @transform_2, window_bounds = array<i64: 8, 512>}, {transform_indices = @transform_3, window_bounds = array<i64: 8, 512>}, {transform_indices = @transform_4, window_bounds = array<i64: 8, 512>}, {transform_indices = @transform_5, window_bounds = array<i64: 8, 512>}, {transform_indices = @transform_6, window_bounds = array<i64: 8, 128>}]} {
    %c0 = arith.constant 0 : index
    %c0_0 = arith.constant 0 : index
    %0 = vector.load %arg1[%c0, %c0_0] : memref<8x512xf32, #tpu.memory_space<vmem>>, vector<8x512xf32>
    %c0_1 = arith.constant 0 : index
    %c0_2 = arith.constant 0 : index
    %1 = vector.load %arg2[%c0_1, %c0_2] : memref<8x512xf32, #tpu.memory_space<vmem>>, vector<8x512xf32>
    %c0_3 = arith.constant 0 : index
    %c0_4 = arith.constant 0 : index
    %2 = vector.load %arg3[%c0_3, %c0_4] : memref<8x512xf32, #tpu.memory_space<vmem>>, vector<8x512xf32>
    %c0_5 = arith.constant 0 : index
    %c0_6 = arith.constant 0 : index
    %3 = vector.load %arg4[%c0_5, %c0_6] : memref<8x512xf32, #tpu.memory_space<vmem>>, vector<8x512xf32>
    %c0_7 = arith.constant 0 : index
    %c0_8 = arith.constant 0 : index
    %4 = vector.load %arg5[%c0_7, %c0_8] : memref<8x512xf32, #tpu.memory_space<vmem>>, vector<8x512xf32>
    %c0_9 = arith.constant 0 : index
    %c0_10 = arith.constant 0 : index
    %5 = vector.load %arg6[%c0_9, %c0_10] : memref<8x512xf32, #tpu.memory_space<vmem>>, vector<8x512xf32>
    %6 = arith.subf %2, %1 : vector<8x512xf32>
    %7 = arith.mulf %6, %6 : vector<8x512xf32>
    %8 = arith.subf %3, %0 : vector<8x512xf32>
    %9 = arith.mulf %8, %8 : vector<8x512xf32>
    %10 = arith.addf %7, %9 : vector<8x512xf32>
    %cst = arith.constant 5.000000e-01 : f32
    %11 = vector.broadcast %cst : f32 to vector<8x512xf32>
    %12 = arith.mulf %11, %10 : vector<8x512xf32>
    %13 = arith.subf %2, %4 : vector<8x512xf32>
    %14 = arith.mulf %13, %13 : vector<8x512xf32>
    %15 = arith.subf %3, %5 : vector<8x512xf32>
    %16 = arith.mulf %15, %15 : vector<8x512xf32>
    %17 = arith.addf %14, %16 : vector<8x512xf32>
    %cst_11 = arith.constant 5.000000e-01 : f32
    %18 = vector.broadcast %cst_11 : f32 to vector<8x512xf32>
    %19 = arith.mulf %18, %17 : vector<8x512xf32>
    %20 = arith.addf %12, %19 : vector<8x512xf32>
    %21 = vector.extract_strided_slice %20 {offsets = [0, 0], sizes = [8, 128], strides = [1, 1]} : vector<8x512xf32> to vector<8x128xf32>
    %22 = vector.extract_strided_slice %20 {offsets = [0, 128], sizes = [8, 128], strides = [1, 1]} : vector<8x512xf32> to vector<8x128xf32>
    %23 = arith.addf %21, %22 : vector<8x128xf32>
    %24 = vector.extract_strided_slice %20 {offsets = [0, 256], sizes = [8, 128], strides = [1, 1]} : vector<8x512xf32> to vector<8x128xf32>
    %25 = arith.addf %23, %24 : vector<8x128xf32>
    %26 = vector.extract_strided_slice %20 {offsets = [0, 384], sizes = [8, 128], strides = [1, 1]} : vector<8x512xf32> to vector<8x128xf32>
    %27 = arith.addf %25, %26 : vector<8x128xf32>
    %c0_12 = arith.constant 0 : index
    %c0_13 = arith.constant 0 : index
    %28 = vector.load %arg7[%c0_12, %c0_13] : memref<8x128xf32, #tpu.memory_space<vmem>>, vector<8x128xf32>
    tpu.vector_store %arg7[%c0_12, %c0_13], %27 {strides = array<i32>} : memref<8x128xf32, #tpu.memory_space<vmem>>, vector<8x128xf32>,
    return
  }
  func.func @transform_0(%arg0: i32) -> (i32, i32) {
    %c0_i32 = arith.constant 0 : i32
    %c0_i32_0 = arith.constant 0 : i32
    return %arg0, %c0_i32 : i32, i32
  }
  func.func @transform_1(%arg0: i32) -> (i32, i32) {
    %c0_i32 = arith.constant 0 : i32
    %c0_i32_0 = arith.constant 0 : i32
    return %arg0, %c0_i32 : i32, i32
  }
  func.func @transform_2(%arg0: i32) -> (i32, i32) {
    %c0_i32 = arith.constant 0 : i32
    %c0_i32_0 = arith.constant 0 : i32
    return %arg0, %c0_i32 : i32, i32
  }
  func.func @transform_3(%arg0: i32) -> (i32, i32) {
    %c0_i32 = arith.constant 0 : i32
    %c0_i32_0 = arith.constant 0 : i32
    return %arg0, %c0_i32 : i32, i32
  }
  func.func @transform_4(%arg0: i32) -> (i32, i32) {
    %c0_i32 = arith.constant 0 : i32
    %c0_i32_0 = arith.constant 0 : i32
    return %arg0, %c0_i32 : i32, i32
  }
  func.func @transform_5(%arg0: i32) -> (i32, i32) {
    %c0_i32 = arith.constant 0 : i32
    %c0_i32_0 = arith.constant 0 : i32
    return %arg0, %c0_i32 : i32, i32
  }
  func.func @transform_6(%arg0: i32) -> (i32, i32) {
    %c0_i32 = arith.constant 0 : i32
    %c0_i32_0 = arith.constant 0 : i32
    return %arg0, %c0_i32 : i32, i32
  }
}

</mosaic_0001>

<llo_original>
// kernel: loss_pallas.1
$region0: #{loss_pallas.1}
  #allocation0 [shape = 'u32[]', space=smem, size = 0x4, offset = 0x4, fixed_abs, tag = 'smem constant byte address 0x4 - core index']
  #allocation1 [shape = 'u32[144,128]{1,0:T(1,128)}', space=vmem, size = 0x12000, scoped, tag = 'internal scratch']
  %s0 = inlined_call_operand.vmem [shape: f32[8,512], index: 0, kind: input, shape index: {}]
  %s1 = inlined_call_operand.vmem [shape: f32[8,512], index: 1, kind: input, shape index: {}]
  %s2 = inlined_call_operand.vmem [shape: f32[8,512], index: 2, kind: input, shape index: {}]
  %s3 = inlined_call_operand.vmem [shape: f32[8,512], index: 3, kind: input, shape index: {}]
  %s4 = inlined_call_operand.vmem [shape: f32[8,512], index: 4, kind: input, shape index: {}]
  %s5 = inlined_call_operand.vmem [shape: f32[8,512], index: 5, kind: input, shape index: {}]
  %s6 = inlined_call_operand.vmem [shape: f32[8,128], index: 6, kind: output, shape index: {}]
  %s7 = sld [smem:[#allocation0]]
  $region34: #{loss_pallas.1} parent=0
    _
  %s9 = ssub.s32 1, %s7
  %s10 = scalar_select 0, %s9, %s7
  // Predicated region
  $region2: #{loss_pallas.1} parent=0 // pred_check
    _
  $region3: #{loss_pallas.1} parent=0 // pred_check_branch
    %12 = sbr.rel (0) target = $region5
  $region4: #{loss_pallas.1} parent=0 // pred_region
    _
  $region5: #{loss_pallas.1} parent=0 // pred_fallthru
    _
  // Predicated region
  $region6: #{loss_pallas.1} parent=0 // pred_check
    _
  $region7: #{loss_pallas.1} parent=0 // pred_check_branch
    %14 = sbr.rel (0) target = $region9
  $region8: #{loss_pallas.1} parent=0 // pred_region
    _
  $region9: #{loss_pallas.1} parent=0 // pred_fallthru
    _
  // Predicated region
  $region10: #{loss_pallas.1} parent=0 // pred_check
    _
  $region11: #{loss_pallas.1} parent=0 // pred_check_branch
    %16 = sbr.rel (0) target = $region13
  $region12: #{loss_pallas.1} parent=0 // pred_region
    _
  $region13: #{loss_pallas.1} parent=0 // pred_fallthru
    _
  // Predicated region
  $region14: #{loss_pallas.1} parent=0 // pred_check
    _
  $region15: #{loss_pallas.1} parent=0 // pred_check_branch
    %18 = sbr.rel (0) target = $region17
  $region16: #{loss_pallas.1} parent=0 // pred_region
    _
  $region17: #{loss_pallas.1} parent=0 // pred_fallthru
    _
  // Predicated region
  $region18: #{loss_pallas.1} parent=0 // pred_check
    _
  $region19: #{loss_pallas.1} parent=0 // pred_check_branch
    %20 = sbr.rel (0) target = $region21
  $region20: #{loss_pallas.1} parent=0 // pred_region
    _
  $region21: #{loss_pallas.1} parent=0 // pred_fallthru
    _
  // Predicated region
  $region22: #{loss_pallas.1} parent=0 // pred_check
    _
  $region23: #{loss_pallas.1} parent=0 // pred_check_branch
    %22 = sbr.rel (0) target = $region25
  $region24: #{loss_pallas.1} parent=0 // pred_region
    _
  $region25: #{loss_pallas.1} parent=0 // pred_fallthru
    _
  %v23 = vld [vmem:[%s0] sm:$0xff]
  %v24 = vld [vmem:[%s0 + $0x8] sm:$0xff]
  %v25 = vld [vmem:[%s0 + $0x10] sm:$0xff]
  %v26 = vld [vmem:[%s0 + $0x18] sm:$0xff]
  %v27 = vld [vmem:[%s1] sm:$0xff]
  %v28 = vld [vmem:[%s1 + $0x8] sm:$0xff]
  %v29 = vld [vmem:[%s1 + $0x10] sm:$0xff]
  %v30 = vld [vmem:[%s1 + $0x18] sm:$0xff]
  %v31 = vld [vmem:[%s2] sm:$0xff]
  %v32 = vld [vmem:[%s2 + $0x8] sm:$0xff]
  %v33 = vld [vmem:[%s2 + $0x10] sm:$0xff]
  %v34 = vld [vmem:[%s2 + $0x18] sm:$0xff]
  %v35 = vld [vmem:[%s3] sm:$0xff]
  %v36 = vld [vmem:[%s3 + $0x8] sm:$0xff]
  %v37 = vld [vmem:[%s3 + $0x10] sm:$0xff]
  %v38 = vld [vmem:[%s3 + $0x18] sm:$0xff]
  %v39 = vld [vmem:[%s4] sm:$0xff]
  %v40 = vld [vmem:[%s4 + $0x8] sm:$0xff]
  %v41 = vld [vmem:[%s4 + $0x10] sm:$0xff]
  %v42 = vld [vmem:[%s4 + $0x18] sm:$0xff]
  %v43 = vld [vmem:[%s5] sm:$0xff]
  %v44 = vld [vmem:[%s5 + $0x8] sm:$0xff]
  %v45 = vld [vmem:[%s5 + $0x10] sm:$0xff]
  %v46 = vld [vmem:[%s5 + $0x18] sm:$0xff]
  %v47 = vsub.f32 %v31, %v27
  %v48 = vsub.f32 %v32, %v28
  %v49 = vsub.f32 %v33, %v29
  %v50 = vsub.f32 %v34, %v30
  %v51 = vmul.f32 %v47, %v47
  %v52 = vmul.f32 %v48, %v48
  %v53 = vmul.f32 %v49, %v49
  %v54 = vmul.f32 %v50, %v50
  %v55 = vsub.f32 %v35, %v23
  %v56 = vsub.f32 %v36, %v24
  %v57 = vsub.f32 %v37, %v25
  %v58 = vsub.f32 %v38, %v26
  %v59 = vmul.f32 %v55, %v55
  %v60 = vmul.f32 %v56, %v56
  %v61 = vmul.f32 %v57, %v57
  %v62 = vmul.f32 %v58, %v58
  %v63 = vadd.f32 %v51, %v59
  %v64 = vadd.f32 %v52, %v60
  %v65 = vadd.f32 %v53, %v61
  %v66 = vadd.f32 %v54, %v62
  %v67 = vmul.f32 %v63, 0.5
  %v68 = vmul.f32 %v64, 0.5
  %v69 = vmul.f32 %v65, 0.5
  %v70 = vmul.f32 %v66, 0.5
  %v71 = vsub.f32 %v31, %v39
  %v72 = vsub.f32 %v32, %v40
  %v73 = vsub.f32 %v33, %v41
  %v74 = vsub.f32 %v34, %v42
  %v75 = vmul.f32 %v71, %v71
  %v76 = vmul.f32 %v72, %v72
  %v77 = vmul.f32 %v73, %v73
  %v78 = vmul.f32 %v74, %v74
  %v79 = vsub.f32 %v35, %v43
  %v80 = vsub.f32 %v36, %v44
  %v81 = vsub.f32 %v37, %v45
  %v82 = vsub.f32 %v38, %v46
  %v83 = vmul.f32 %v79, %v79
  %v84 = vmul.f32 %v80, %v80
  %v85 = vmul.f32 %v81, %v81
  %v86 = vmul.f32 %v82, %v82
  %v87 = vadd.f32 %v75, %v83
  %v88 = vadd.f32 %v76, %v84
  %v89 = vadd.f32 %v77, %v85
  %v90 = vadd.f32 %v78, %v86
  %v91 = vmul.f32 %v87, 0.5
  %v92 = vmul.f32 %v88, 0.5
  %v93 = vmul.f32 %v89, 0.5
  %v94 = vmul.f32 %v90, 0.5
  %v95 = vadd.f32 %v67, %v91
  %v96 = vadd.f32 %v68, %v92
  %v97 = vadd.f32 %v69, %v93
  %v98 = vadd.f32 %v70, %v94
  %v99 = vadd.f32 %v95, %v96
  %v100 = vadd.f32 %v99, %v97
  %v101 = vadd.f32 %v100, %v98
  %102 = vst [vmem:[%s6] sm:$0xff] %v101
  // Predicated region
  $region26: #{loss_pallas.1} parent=0 // pred_check
    _
  $region27: #{loss_pallas.1} parent=0 // pred_check_branch
    %104 = sbr.rel (0) target = $region29
  $region28: #{loss_pallas.1} parent=0 // pred_region
    _
  $region29: #{loss_pallas.1} parent=0 // pred_fallthru
    _
  // Predicated region
  $region30: #{loss_pallas.1} parent=0 // pred_check
    _
  $region31: #{loss_pallas.1} parent=0 // pred_check_branch
    %106 = sbr.rel (0) target = $region33
  $region32: #{loss_pallas.1} parent=0 // pred_region
    _
  $region33: #{loss_pallas.1} parent=0 // pred_fallthru
    _

</llo_original>
